<compile_context>
chip_gen: v7x
topology: tpu7x:2x2x1
jax: 0.10.0
libtpu: 0.0.40
codegen_flags: <defaults>
</compile_context>

<pallas_src>
import math

import jax
import jax.numpy as jnp
from jax.experimental import pallas as pl
from jax.experimental.pallas import tpu as pltpu

_MIB = 1 << 20


def _round_up(n: int, m: int) -> int:
    return ((n + m - 1) // m) * m


def _vmem_capacity_bytes() -> int:
    """Physical VMEM per TensorCore (generation-aware, with safe fallbacks)."""
    try:
        return int(pltpu.get_tpu_info().vmem_capacity_bytes)
    except Exception:
        pass
    try:
        kind = jax.devices()[0].device_kind.lower()
    except Exception:
        kind = ""
    if "v7" in kind:
        return 64 * _MIB
    return 128 * _MIB  # v4 / v5e / v5p / v6e


# --------------------------------------------------------------------------
# Kernels
# --------------------------------------------------------------------------
def _ffn_kernel_resident(x_ref, w1_ref, b1_ref, w2_ref, b2_ref, o_ref):
    # Weights fully VMEM-resident: single fused pass, no accumulator scratch,
    # output written exactly once (minimizes vst-slot pressure).
    x = x_ref[...].astype(jnp.bfloat16)  # in-kernel cast hides under the MXU
    h = jnp.dot(x, w1_ref[...], preferred_element_type=jnp.float32)
    h = jnp.maximum(h + b1_ref[...], 0.0)
    # TODO(synk): dropout is identity in eval mode; training-mode dropout would
    # use pltpu.prng_seed / pltpu.prng_random_bits and scale by 1/(1-p).
    y = jnp.dot(h.astype(jnp.bfloat16), w2_ref[...],
                preferred_element_type=jnp.float32)
    o_ref[...] = (y + b2_ref[...]).astype(o_ref.dtype)


def _ffn_kernel_tiled(x_ref, w1_ref, b1_ref, w2_ref, b2_ref, o_ref):
    # 4H axis tiled on grid axis 1 ("arbitrary"). The f32 output block index
    # (i, 0) is constant across j, so o_ref stays VMEM-resident and doubles
    # as the accumulator: no scratch, no zero-init pass, no epilogue copy.
    j = pl.program_id(1)
    x = x_ref[...].astype(jnp.bfloat16)
    h = jnp.dot(x, w1_ref[...], preferred_element_type=jnp.float32)
    h = jnp.maximum(h + b1_ref[...], 0.0)
    part = jnp.dot(h.astype(jnp.bfloat16), w2_ref[...],
                   preferred_element_type=jnp.float32)

    @pl.when(j == 0)
    def _():
        o_ref[...] = part + b2_ref[...]  # b2 folded into the first write

    @pl.when(j != 0)
    def _():
        o_ref[...] += part


# --------------------------------------------------------------------------
# Wrapper
# --------------------------------------------------------------------------
def feed_forward_network(x, w1, b1, w2, b2, *, tm=None, tk=None):
    """y = relu(x @ w1 + b1) @ w2 + b2  (eval-mode FFN; dropout is identity).

    x: [..., H]; w1: [H, 4H]; b1: [4H]; w2: [4H, H]; b2: [H].
    For best performance pass w1/w2 already cast to bf16 (otherwise they are
    cast here, one extra HBM pass per call).
    """
    hidden = x.shape[-1]
    ffn = w1.shape[1]
    orig_shape = x.shape
    orig_dtype = x.dtype

    phys_vmem = _vmem_capacity_bytes()
    big_vmem = phys_vmem >= 128 * _MIB
    # Headroom for Mosaic internal scratch: ~100 MiB usable on 128-MiB chips
    # (v5e/v6e), ~50 MiB on v7x (64 MiB per TensorCore).
    vmem_cap = (100 * _MIB) if big_vmem else (50 * _MIB)
    two_cores = not big_vmem  # v7x: 2 TensorCores share the "parallel" axis

    x2d = x.reshape(-1, hidden)
    n_tok = x2d.shape[0]
    x_bytes = jnp.dtype(x2d.dtype).itemsize

    # ---- residency decision (single-buffered bf16 W1+W2 + intermediates) ---
    out_dtype_res = orig_dtype if orig_dtype in (jnp.bfloat16, jnp.float32) \
        else jnp.float32
    ob_res = jnp.dtype(out_dtype_res).itemsize
    tm_probe = max(16, _round_up(min(256, _round_up(max(n_tok, 1), 16)), 16))
    resident_fp = (
        2 * hidden * ffn * 2 + ffn * 4 + hidden * 4        # W1+W2 bf16, b1/b2
        + 2 * tm_probe * hidden * x_bytes                  # x, double-buffered
        + 2 * tm_probe * hidden * ob_res                   # out, double-buffered
        + tm_probe * ffn * 6 + tm_probe * hidden * 2       # h (f32+bf16), x bf16
        + 2 * _MIB                                         # slack
    )
    if tk is not None:
        resident = tk >= ffn
    else:
        resident = resident_fp <= vmem_cap
    # TODO(synk): for very large resident ffn on v7x an in-kernel pl.ds chunk
    # loop over the 4H axis would bound the h intermediate without
    # re-streaming weights; not needed within the budgets above.

    # ---- token tile -------------------------------------------------------
    if resident:
        tm_eff = 256 if tm is None else tm
        out_dtype = out_dtype_res
    else:
        # Streamed weights: arithmetic intensity ~ tm flops per weight byte,
        # so push tm toward the machine-balance point.
        tm_eff = (1024 if big_vmem else 512) if tm is None else tm
        out_dtype = jnp.float32  # accumulated in place in the output block
    tm_eff = max(16, _round_up(min(tm_eff, _round_up(max(n_tok, 1), 16)), 16))

    if not resident:
        # Keep double-buffered x + f32 output tiles within ~half the cap.
        row_bytes = 2 * hidden * x_bytes + 2 * hidden * 4 + hidden * 2
        max_tm = max(16, ((vmem_cap // 2) // max(row_bytes, 1)) // 16 * 16)
        tm_eff = min(tm_eff, max_tm)

    if two_cores and n_tok > 16:
        # Guarantee >= 2 token tiles so both v7x TensorCores get work.
        if _round_up(n_tok, tm_eff) // tm_eff < 2:
            tm_eff = max(16, _round_up((n_tok + 1) // 2, 16))

    n_pad = _round_up(n_tok, tm_eff)
    if n_pad != n_tok:
        x2d = jnp.pad(x2d, ((0, n_pad - n_tok), (0, 0)))

    # ---- weights / biases (bf16 MXU feeds, f32 epilogue) -------------------
    # Pre-cast once outside this function (bf16 params) to avoid this pass.
    w1b = w1 if w1.dtype == jnp.bfloat16 else w1.astype(jnp.bfloat16)
    w2b = w2 if w2.dtype == jnp.bfloat16 else w2.astype(jnp.bfloat16)
    b1_2d = b1.reshape(1, ffn).astype(jnp.float32)
    b2_2d = b2.reshape(1, hidden).astype(jnp.float32)

    # ---- 4H tiling ---------------------------------------------------------
    if resident:
        tk_eff = ffn
        ffn_pad = ffn
        n_j = 1
    else:
        if tk is not None:
            tk_eff = max(128, _round_up(tk, 128))
        else:
            fixed = (2 * tm_eff * hidden * x_bytes + 2 * tm_eff * hidden * 4
                     + tm_eff * hidden * 2 + hidden * 4 + 2 * _MIB)
            per_tk = 2 * (2 * hidden * 2 + 4) + tm_eff * 6
            avail = max(vmem_cap - fixed, per_tk * 128)
            tk_eff = max(128, (avail // per_tk) // 128 * 128)
        tk_eff = min(tk_eff, _round_up(ffn, 128))
        ffn_pad = _round_up(ffn, tk_eff)
        n_j = ffn_pad // tk_eff
        if ffn_pad != ffn:
            # Zero-pad the 4H axis: relu(0+0)=0 and 0 @ w2 contributes 0.
            w1b = jnp.pad(w1b, ((0, 0), (0, ffn_pad - ffn)))
            b1_2d = jnp.pad(b1_2d, ((0, 0), (0, ffn_pad - ffn)))
            w2b = jnp.pad(w2b, ((0, ffn_pad - ffn), (0, 0)))

    def _call(use_buffered: bool):
        if resident:
            w_mode = pl.Buffered(1) if use_buffered else None
            wbuf = 1 if use_buffered else 2
        else:
            want3 = (big_vmem and use_buffered
                     and 3 * (2 * hidden * tk_eff * 2) <= vmem_cap // 2)
            w_mode = pl.Buffered(3) if want3 else None
            wbuf = 3 if want3 else 2

        def _spec(shape, imap, mode=None):
            if mode is None:
                return pl.BlockSpec(shape, imap)
            return pl.BlockSpec(shape, imap, pipeline_mode=mode)

        if resident:
            grid = (n_pad // tm_eff,)
            in_specs = [
                _spec((tm_eff, hidden), lambda i: (i, 0)),           # x tile
                _spec((hidden, ffn_pad), lambda i: (0, 0), w_mode),  # W1
                _spec((1, ffn_pad), lambda i: (0, 0), w_mode),       # b1
                _spec((ffn_pad, hidden), lambda i: (0, 0), w_mode),  # W2
                _spec((1, hidden), lambda i: (0, 0), w_mode),        # b2
            ]
            out_spec = pl.BlockSpec((tm_eff, hidden), lambda i: (i, 0))
            kernel = _ffn_kernel_resident
            dims = ("parallel",)
        else:
            grid = (n_pad // tm_eff, n_j)
            in_specs = [
                _spec((tm_eff, hidden), lambda i, j: (i, 0)),        # x tile
                _spec((hidden, tk_eff), lambda i, j: (0, j), w_mode),  # W1
                _spec((1, tk_eff), lambda i, j: (0, j), w_mode),       # b1
                _spec((tk_eff, hidden), lambda i, j: (j, 0), w_mode),  # W2
                _spec((1, hidden), lambda i, j: (0, 0)),               # b2
            ]
            out_spec = pl.BlockSpec((tm_eff, hidden), lambda i, j: (i, 0))
            kernel = _ffn_kernel_tiled
            dims = ("parallel", "arbitrary")

        ob = jnp.dtype(out_dtype).itemsize
        weight_blk = 2 * hidden * tk_eff * 2 + tk_eff * 4
        vmem_bytes = (
            2 * tm_eff * hidden * x_bytes        # x, double-buffered
            + 2 * tm_eff * hidden * ob           # out, double-buffered
            + wbuf * weight_blk + 2 * hidden * 4  # weights + biases
            + tm_eff * tk_eff * 6                # h (f32 + bf16 copy)
            + tm_eff * hidden * 2                # x bf16 copy
            + 2 * _MIB
        )
        vmem_limit = int(min(max(vmem_bytes * 1.25, 32 * _MIB), vmem_cap))

        restream = 1 if resident else (n_pad // tm_eff)
        cost = pl.CostEstimate(
            flops=4 * n_pad * hidden * ffn_pad,  # two matmuls, 2 flops per MAC
            transcendentals=0,
            bytes_accessed=(n_pad * hidden * x_bytes
                            + restream * 2 * hidden * ffn_pad * 2
                            + ffn_pad * 4 + hidden * 4
                            + n_pad * hidden * ob),
        )

        return pl.pallas_call(
            kernel,
            out_shape=jax.ShapeDtypeStruct((n_pad, hidden), out_dtype),
            grid_spec=pltpu.PrefetchScalarGridSpec(
                num_scalar_prefetch=0,
                grid=grid,
                in_specs=in_specs,
                out_specs=out_spec,
            ),
            compiler_params=pltpu.CompilerParams(
                dimension_semantics=dims,
                vmem_limit_bytes=vmem_limit,
            ),
            cost_estimate=cost,
        )(x2d, w1b, b1_2d, w2b, b2_2d)

    try:
        out = _call(True)
    except Exception as err:  # fall back ONLY for buffering-related failures
        msg = f"{type(err).__name__}: {err}"
        buffering_issue = isinstance(err, TypeError) or any(
            s in msg for s in ("Buffered", "pipeline_mode", "buffer_count"))
        if not buffering_issue:
            raise
        out = _call(False)

    out = out[:n_tok]
    if out.dtype != orig_dtype:
        out = out.astype(orig_dtype)
    return out.reshape(orig_shape)


def xavier_uniform(key, fan_out, fan_in, dtype=jnp.float32):
    # torch.nn.init.xavier_uniform_ on a [out, in] weight
    limit = math.sqrt(6.0 / (fan_in + fan_out))
    return jax.random.uniform(key, (fan_out, fan_in), dtype, -limit, limit)


if __name__ == "__main__":
    hidden_dim = 128           # small but lane-friendly (lane = 128)
    batch, seq = 2, 8
    ffn_dim = hidden_dim * 4

    key = jax.random.PRNGKey(0)
    kx, k1, k2 = jax.random.split(key, 3)

    # PyTorch-convention [out, in] weights, transposed to [in, out] for the kernel.
    w1 = xavier_uniform(k1, ffn_dim, hidden_dim).T   # [H, 4H]
    w2 = xavier_uniform(k2, hidden_dim, ffn_dim).T   # [4H, H]
    b1 = jnp.zeros((ffn_dim,), jnp.float32)
    b2 = jnp.zeros((hidden_dim,), jnp.float32)

    # Pre-cast weights once (recommended: store bf16 params so the wrapper
    # never re-casts in the per-layer hot path).
    w1_bf16 = w1.astype(jnp.bfloat16)
    w2_bf16 = w2.astype(jnp.bfloat16)

    x = jax.random.normal(kx, (batch, seq, hidden_dim), jnp.float32)

    y = feed_forward_network(x, w1_bf16, b1, w2_bf16, b2)
    y = jax.block_until_ready(y)

    # Eval-mode reference in f32 using the same bf16-rounded weights (the
    # kernel also casts x and the ReLU intermediate to bf16 for the MXU,
    # hence the relaxed tolerance).
    w1_f = w1_bf16.astype(jnp.float32)
    w2_f = w2_bf16.astype(jnp.float32)
    ref = jnp.maximum(x @ w1_f + b1, 0.0) @ w2_f + b2

    assert y.shape == x.shape and y.dtype == x.dtype
    err = float(jnp.max(jnp.abs(y - ref)))
    assert jnp.allclose(y, ref, atol=5e-2, rtol=5e-2), err

    print("KERNEL_OK")
</pallas_src>

<mosaic_0001>
module attributes {stable_mosaic.version = 11 : i64} {
  func.func @_ffn_kernel_resident(%arg0: i32, %arg1: memref<16x128xf32, #tpu.memory_space<vmem>>, %arg2: memref<128x512xbf16, #tpu.memory_space<vmem>>, %arg3: memref<1x512xf32, #tpu.memory_space<vmem>>, %arg4: memref<512x128xbf16, #tpu.memory_space<vmem>>, %arg5: memref<1x128xf32, #tpu.memory_space<vmem>>, %arg6: memref<16x128xf32, #tpu.memory_space<vmem>>) attributes {dimension_semantics = [#tpu.dimension_semantics<parallel>], iteration_bounds = array<i64: 1>, scalar_prefetch = 0 : i64, scratch_operands = 0 : i64, tpu.core_type = #tpu.core_type<tc>, window_params = [{transform_indices = @transform_0, window_bounds = array<i64: 16, 128>}, {pipeline_mode = #tpu.pipeline_mode<synchronous>, transform_indices = @transform_1, window_bounds = array<i64: 128, 512>}, {pipeline_mode = #tpu.pipeline_mode<synchronous>, transform_indices = @transform_2, window_bounds = array<i64: 1, 512>}, {pipeline_mode = #tpu.pipeline_mode<synchronous>, transform_indices = @transform_3, window_bounds = array<i64: 512, 128>}, {pipeline_mode = #tpu.pipeline_mode<synchronous>, transform_indices = @transform_4, window_bounds = array<i64: 1, 128>}, {transform_indices = @transform_5, window_bounds = array<i64: 16, 128>}]} {
    %c0 = arith.constant 0 : index
    %c0_0 = arith.constant 0 : index
    %0 = vector.load %arg1[%c0, %c0_0] : memref<16x128xf32, #tpu.memory_space<vmem>>, vector<16x128xf32>
    %1 = arith.truncf %0 : vector<16x128xf32> to vector<16x128xbf16>
    %c0_1 = arith.constant 0 : index
    %c0_2 = arith.constant 0 : index
    %2 = vector.load %arg2[%c0_1, %c0_2] : memref<128x512xbf16, #tpu.memory_space<vmem>>, vector<128x512xbf16>
    %cst = arith.constant dense<0.000000e+00> : vector<16x512xf32>
    %3 = tpu.matmul %1, %2, %cst {dimension_numbers = #tpu.dot_dimension_numbers<[1], [0], [0], [1], [0, 0, 1, 1], [], []>} : vector<16x128xbf16>, vector<128x512xbf16>, vector<16x512xf32> -> vector<16x512xf32>
    %c0_3 = arith.constant 0 : index
    %c0_4 = arith.constant 0 : index
    %4 = vector.load %arg3[%c0_3, %c0_4] : memref<1x512xf32, #tpu.memory_space<vmem>>, vector<1x512xf32>
    %5 = vector.broadcast %4 : vector<1x512xf32> to vector<16x512xf32>
    %6 = arith.addf %3, %5 : vector<16x512xf32>
    %cst_5 = arith.constant 0.000000e+00 : f32
    %7 = vector.broadcast %cst_5 : f32 to vector<16x512xf32>
    %8 = arith.maximumf %6, %7 : vector<16x512xf32>
    %9 = arith.truncf %8 : vector<16x512xf32> to vector<16x512xbf16>
    %c0_6 = arith.constant 0 : index
    %c0_7 = arith.constant 0 : index
    %10 = vector.load %arg4[%c0_6, %c0_7] : memref<512x128xbf16, #tpu.memory_space<vmem>>, vector<512x128xbf16>
    %cst_8 = arith.constant dense<0.000000e+00> : vector<16x128xf32>
    %11 = tpu.matmul %9, %10, %cst_8 {dimension_numbers = #tpu.dot_dimension_numbers<[1], [0], [0], [1], [0, 0, 1, 1], [], []>} : vector<16x512xbf16>, vector<512x128xbf16>, vector<16x128xf32> -> vector<16x128xf32>
    %c0_9 = arith.constant 0 : index
    %c0_10 = arith.constant 0 : index
    %12 = vector.load %arg5[%c0_9, %c0_10] : memref<1x128xf32, #tpu.memory_space<vmem>>, vector<1x128xf32>
    %13 = vector.broadcast %12 : vector<1x128xf32> to vector<16x128xf32>
    %14 = arith.addf %11, %13 : vector<16x128xf32>
    %c0_11 = arith.constant 0 : index
    %c0_12 = arith.constant 0 : index
    %15 = vector.load %arg6[%c0_11, %c0_12] : memref<16x128xf32, #tpu.memory_space<vmem>>, vector<16x128xf32>
    tpu.vector_store %arg6[%c0_11, %c0_12], %14 {strides = array<i32>} : memref<16x128xf32, #tpu.memory_space<vmem>>, vector<16x128xf32>,
    return
  }
  func.func @transform_0(%arg0: i32) -> (i32, i32) {
    %c0_i32 = arith.constant 0 : i32
    %c0_i32_0 = arith.constant 0 : i32
    return %arg0, %c0_i32 : i32, i32
  }
  func.func @transform_1(%arg0: i32) -> (i32, i32) {
    %c0_i32 = arith.constant 0 : i32
    %c0_i32_0 = arith.constant 0 : i32
    %c0_i32_1 = arith.constant 0 : i32
    return %c0_i32, %c0_i32_0 : i32, i32
  }
  func.func @transform_2(%arg0: i32) -> (i32, i32) {
    %c0_i32 = arith.constant 0 : i32
    %c0_i32_0 = arith.constant 0 : i32
    %c0_i32_1 = arith.constant 0 : i32
    return %c0_i32, %c0_i32_0 : i32, i32
  }
  func.func @transform_3(%arg0: i32) -> (i32, i32) {
    %c0_i32 = arith.constant 0 : i32
    %c0_i32_0 = arith.constant 0 : i32
    %c0_i32_1 = arith.constant 0 : i32
    return %c0_i32, %c0_i32_0 : i32, i32
  }
  func.func @transform_4(%arg0: i32) -> (i32, i32) {
    %c0_i32 = arith.constant 0 : i32
    %c0_i32_0 = arith.constant 0 : i32
    %c0_i32_1 = arith.constant 0 : i32
    return %c0_i32, %c0_i32_0 : i32, i32
  }
  func.func @transform_5(%arg0: i32) -> (i32, i32) {
    %c0_i32 = arith.constant 0 : i32
    %c0_i32_0 = arith.constant 0 : i32
    return %arg0, %c0_i32 : i32, i32
  }
}

</mosaic_0001>

<llo_original>
// kernel: tpu_custom_call.1
$region0: #{tpu_custom_call.1}
  #allocation0 [shape = 'u32[]', space=smem, size = 0x4, offset = 0x4, fixed_abs, tag = 'smem constant byte address 0x4 - core index']
  #allocation1 [shape = 'u32[144,128]{1,0:T(1,128)}', space=vmem, size = 0x12000, scoped, tag = 'internal scratch']
  %s0 = inlined_call_operand.hbm [shape: f32[16,128], index: 0, kind: input, shape index: {}]
  %s1 = inlined_call_operand.hbm [shape: bf16[128,512], index: 1, kind: input, shape index: {}]
  %s2 = inlined_call_operand.vmem [shape: f32[1,512], index: 2, kind: input, shape index: {}]
  %s3 = inlined_call_operand.hbm [shape: bf16[512,128], index: 3, kind: input, shape index: {}]
  %s4 = inlined_call_operand.vmem [shape: f32[1,128], index: 4, kind: input, shape index: {}]
  %s5 = inlined_call_operand.hbm [shape: f32[16,128], index: 5, kind: output, shape index: {}]
  %s6 = sld [smem:[#allocation0]]
  $region42: #{tpu_custom_call.1} parent=0
    _
  %s8 = ssub.s32 1, %s6
  %s9 = scalar_select 0, %s8, %s6
  $region1: #{tpu_custom_call.1} parent=0
    #allocation2 [shape = 'u8[8192]{0}', space=vmem, size = 0x2000, scoped, tag = 'input window, operand 0, single buffered']
    #allocation3 [shape = 's32[1]{0}', space=sflag, size = 0x4, scoped, tag = 'scoped memory for tpu_custom_call.1']
    #allocation4 [shape = 's32[1]{0}', space=sflag, size = 0x4, scoped, tag = 'scoped memory for tpu_custom_call.1']
    #allocation5 [shape = 'u8[131072]{0}', space=vmem, size = 0x20000, scoped, tag = 'input window, operand 1, single buffered']
    #allocation6 [shape = 's32[1]{0}', space=sflag, size = 0x4, scoped, tag = 'scoped memory for tpu_custom_call.1']
    #allocation7 [shape = 'u8[131072]{0}', space=vmem, size = 0x20000, scoped, tag = 'input window, operand 3, single buffered']
    #allocation8 [shape = 'u8[8192]{0}', space=vmem, size = 0x2000, scoped, tag = 'output window, operand 0, single buffered']
    %10 = vsyncpa [#allocation3], 0
    %11 = vsyncpa [#allocation6], 0
    %12 = vsyncpa [#allocation4], 0
    // Predicated region
    $region2: #{tpu_custom_call.1} parent=1 // pred_check
      _
    $region3: #{tpu_custom_call.1} parent=1 // pred_check_branch
      %14 = sbr.rel (0) target = $region5
    $region4: #{tpu_custom_call.1} parent=1 // pred_region
      %s16 = ssub.s32 256, 256
      %17 = vsyncadd [#allocation3], %s16
      %s18 = sshll.u32 [#allocation2], 4
      %s19 = int_to_ptr.vmem [resolvable:$true] %s18
      %24 = dma.hbm_to_vmem [thread:$0]  %s0, 256, %s19, [#allocation3], 128, 128, 8
    $region5: #{tpu_custom_call.1} parent=1 // pred_fallthru
      _
    // Predicated region
    $region6: #{tpu_custom_call.1} parent=1 // pred_check
      _
    $region7: #{tpu_custom_call.1} parent=1 // pred_check_branch
      %26 = sbr.rel (0) target = $region9
    $region8: #{tpu_custom_call.1} parent=1 // pred_region
      %s28 = ssub.s32 4096, 4096
      %29 = vsyncadd [#allocation6], %s28
      %s30 = sshll.u32 [#allocation5], 4
      %s31 = int_to_ptr.vmem [resolvable:$true] %s30
      %36 = dma.hbm_to_vmem [thread:$0]  %s1, 4096, %s31, [#allocation6], 256, 256, 16
    $region9: #{tpu_custom_call.1} parent=1 // pred_fallthru
      _
    // Predicated region
    $region10: #{tpu_custom_call.1} parent=1 // pred_check
      _
    $region11: #{tpu_custom_call.1} parent=1 // pred_check_branch
      %38 = sbr.rel (0) target = $region13
    $region12: #{tpu_custom_call.1} parent=1 // pred_region
      _
    $region13: #{tpu_custom_call.1} parent=1 // pred_fallthru
      _
    // Predicated region
    $region14: #{tpu_custom_call.1} parent=1 // pred_check
      _
    $region15: #{tpu_custom_call.1} parent=1 // pred_check_branch
      %40 = sbr.rel (0) target = $region17
    $region16: #{tpu_custom_call.1} parent=1 // pred_region
      %s42 = ssub.s32 4096, 4096
      %43 = vsyncadd [#allocation6], %s42
      %s44 = sshll.u32 [#allocation7], 4
      %s45 = int_to_ptr.vmem [resolvable:$true] %s44
      %50 = dma.hbm_to_vmem [thread:$0]  %s3, 4096, %s45, [#allocation6], 64, 64, 4
    $region17: #{tpu_custom_call.1} parent=1 // pred_fallthru
      _
    // Predicated region
    $region18: #{tpu_custom_call.1} parent=1 // pred_check
      _
    $region19: #{tpu_custom_call.1} parent=1 // pred_check_branch
      %52 = sbr.rel (0) target = $region21
    $region20: #{tpu_custom_call.1} parent=1 // pred_region
      _
    $region21: #{tpu_custom_call.1} parent=1 // pred_fallthru
      _
    // Predicated region
    $region22: #{tpu_custom_call.1} parent=1 // pred_check
      _
    $region23: #{tpu_custom_call.1} parent=1 // pred_check_branch
      %54 = sbr.rel (0) target = $region25
    $region24: #{tpu_custom_call.1} parent=1 // pred_region
      %55 = dma.done [#allocation3], 256
    $region25: #{tpu_custom_call.1} parent=1 // pred_fallthru
      _
    // Predicated region
    $region26: #{tpu_custom_call.1} parent=1 // pred_check
      _
    $region27: #{tpu_custom_call.1} parent=1 // pred_check_branch
      %57 = sbr.rel (0) target = $region29
    $region28: #{tpu_custom_call.1} parent=1 // pred_region
      %58 = dma.done [#allocation6], 4096
    $region29: #{tpu_custom_call.1} parent=1 // pred_fallthru
      _
    // Predicated region
    $region30: #{tpu_custom_call.1} parent=1 // pred_check
      _
    $region31: #{tpu_custom_call.1} parent=1 // pred_check_branch
      %60 = sbr.rel (0) target = $region33
    $region32: #{tpu_custom_call.1} parent=1 // pred_region
      %61 = dma.done [#allocation6], 4096
    $region33: #{tpu_custom_call.1} parent=1 // pred_fallthru
      _
    %v63 = vld [vmem:[#allocation2] sm:$0xff]
    %v64 = vld [vmem:[#allocation2 + $0x8] sm:$0xff]
    %v65 = vpack.c.bf16 %v64, %v63
    %v66 = vld [vmem:[#allocation5] sm:$0xff]
    %v67 = vld [vmem:[#allocation5 + $0x8] sm:$0xff]
    %v68 = vld [vmem:[#allocation5 + $0x10] sm:$0xff]
    %v69 = vld [vmem:[#allocation5 + $0x18] sm:$0xff]
    %v70 = vld [vmem:[#allocation5 + $0x20] sm:$0xff]
    %v71 = vld [vmem:[#allocation5 + $0x28] sm:$0xff]
    %v72 = vld [vmem:[#allocation5 + $0x30] sm:$0xff]
    %v73 = vld [vmem:[#allocation5 + $0x38] sm:$0xff]
    %v74 = vld [vmem:[#allocation5 + $0x40] sm:$0xff]
    %v75 = vld [vmem:[#allocation5 + $0x48] sm:$0xff]
    %v76 = vld [vmem:[#allocation5 + $0x50] sm:$0xff]
    %v77 = vld [vmem:[#allocation5 + $0x58] sm:$0xff]
    %v78 = vld [vmem:[#allocation5 + $0x60] sm:$0xff]
    %v79 = vld [vmem:[#allocation5 + $0x68] sm:$0xff]
    %v80 = vld [vmem:[#allocation5 + $0x70] sm:$0xff]
    %v81 = vld [vmem:[#allocation5 + $0x78] sm:$0xff]
    %v82 = vld [vmem:[#allocation5 + $0x80] sm:$0xff]
    %v83 = vld [vmem:[#allocation5 + $0x88] sm:$0xff]
    %v84 = vld [vmem:[#allocation5 + $0x90] sm:$0xff]
    %v85 = vld [vmem:[#allocation5 + $0x98] sm:$0xff]
    %v86 = vld [vmem:[#allocation5 + $0xa0] sm:$0xff]
    %v87 = vld [vmem:[#allocation5 + $0xa8] sm:$0xff]
    %v88 = vld [vmem:[#allocation5 + $0xb0] sm:$0xff]
    %v89 = vld [vmem:[#allocation5 + $0xb8] sm:$0xff]
    %v90 = vld [vmem:[#allocation5 + $0xc0] sm:$0xff]
    %v91 = vld [vmem:[#allocation5 + $0xc8] sm:$0xff]
    %v92 = vld [vmem:[#allocation5 + $0xd0] sm:$0xff]
    %v93 = vld [vmem:[#allocation5 + $0xd8] sm:$0xff]
    %v94 = vld [vmem:[#allocation5 + $0xe0] sm:$0xff]
    %v95 = vld [vmem:[#allocation5 + $0xe8] sm:$0xff]
    %v96 = vld [vmem:[#allocation5 + $0xf0] sm:$0xff]
    %v97 = vld [vmem:[#allocation5 + $0xf8] sm:$0xff]
    %v98 = vld [vmem:[%s2] sm:$0xf]
    %v100 = vlaneseq
    %v101 = vshrl.u32 %v100, 7
    %v102 = vsub.s32 0, %v101
    %v103 = vrot.slane %v98, %v102
    %v104 = vlaneseq
    %v105 = vshrl.u32 %v104, 7
    %v106 = vsub.s32 1, %v105
    %v107 = vrot.slane %v98, %v106
    %v108 = vlaneseq
    %v109 = vshrl.u32 %v108, 7
    %v110 = vsub.s32 2, %v109
    %v111 = vrot.slane %v98, %v110
    %v112 = vlaneseq
    %v113 = vshrl.u32 %v112, 7
    %v114 = vsub.s32 3, %v113
    %v115 = vrot.slane %v98, %v114
    %v152 = vunpack.c.l.b16 %v66
    %v153 = vunpack.c.h.b16 %v66
    %v154 = vunpack.c.l.b16 %v67
    %v155 = vunpack.c.h.b16 %v67
    %v156 = vunpack.c.l.b16 %v68
    %v157 = vunpack.c.h.b16 %v68
    %v158 = vunpack.c.l.b16 %v69
    %v159 = vunpack.c.h.b16 %v69
    %v160 = vunpack.c.l.b16 %v70
    %v161 = vunpack.c.h.b16 %v70
    %v162 = vunpack.c.l.b16 %v71
    %v163 = vunpack.c.h.b16 %v71
    %v164 = vunpack.c.l.b16 %v72
    %v165 = vunpack.c.h.b16 %v72
    %v166 = vunpack.c.l.b16 %v73
    %v167 = vunpack.c.h.b16 %v73
    %v168 = vunpack.c.l.b16 %v74
    %v169 = vunpack.c.h.b16 %v74
    %v170 = vunpack.c.l.b16 %v75
    %v171 = vunpack.c.h.b16 %v75
    %v172 = vunpack.c.l.b16 %v76
    %v173 = vunpack.c.h.b16 %v76
    %v174 = vunpack.c.l.b16 %v77
    %v175 = vunpack.c.h.b16 %v77
    %v176 = vunpack.c.l.b16 %v78
    %v177 = vunpack.c.h.b16 %v78
    %v178 = vunpack.c.l.b16 %v79
    %v179 = vunpack.c.h.b16 %v79
    %v180 = vunpack.c.l.b16 %v80
    %v181 = vunpack.c.h.b16 %v80
    %v182 = vunpack.c.l.b16 %v81
    %v183 = vunpack.c.h.b16 %v81
    %v184 = vunpack.c.l.b16 %v82
    %v185 = vunpack.c.h.b16 %v82
    %v186 = vunpack.c.l.b16 %v83
    %v187 = vunpack.c.h.b16 %v83
    %v188 = vunpack.c.l.b16 %v84
    %v189 = vunpack.c.h.b16 %v84
    %v190 = vunpack.c.l.b16 %v85
    %v191 = vunpack.c.h.b16 %v85
    %v192 = vunpack.c.l.b16 %v86
    %v193 = vunpack.c.h.b16 %v86
    %v194 = vunpack.c.l.b16 %v87
    %v195 = vunpack.c.h.b16 %v87
    %v196 = vunpack.c.l.b16 %v88
    %v197 = vunpack.c.h.b16 %v88
    %v198 = vunpack.c.l.b16 %v89
    %v199 = vunpack.c.h.b16 %v89
    %v200 = vunpack.c.l.b16 %v90
    %v201 = vunpack.c.h.b16 %v90
    %v202 = vunpack.c.l.b16 %v91
    %v203 = vunpack.c.h.b16 %v91
    %v204 = vunpack.c.l.b16 %v92
    %v205 = vunpack.c.h.b16 %v92
    %v206 = vunpack.c.l.b16 %v93
    %v207 = vunpack.c.h.b16 %v93
    %v208 = vunpack.c.l.b16 %v94
    %v209 = vunpack.c.h.b16 %v94
    %v210 = vunpack.c.l.b16 %v95
    %v211 = vunpack.c.h.b16 %v95
    %v212 = vunpack.c.l.b16 %v96
    %v213 = vunpack.c.h.b16 %v96
    %v214 = vunpack.c.l.b16 %v97
    %v215 = vunpack.c.h.b16 %v97
    %v216 = vpack.c.b16 %v156, %v152
    %v217 = vpack.c.b16 %v157, %v153
    %v218 = vpack.c.b16 %v158, %v154
    %v219 = vpack.c.b16 %v159, %v155
    %v220 = vpack.c.b16 %v164, %v160
    %v221 = vpack.c.b16 %v165, %v161
    %v222 = vpack.c.b16 %v166, %v162
    %v223 = vpack.c.b16 %v167, %v163
    %v224 = vpack.c.b16 %v172, %v168
    %v225 = vpack.c.b16 %v173, %v169
    %v226 = vpack.c.b16 %v174, %v170
    %v227 = vpack.c.b16 %v175, %v171
    %v228 = vpack.c.b16 %v180, %v176
    %v229 = vpack.c.b16 %v181, %v177
    %v230 = vpack.c.b16 %v182, %v178
    %v231 = vpack.c.b16 %v183, %v179
    %v232 = vpack.c.b16 %v188, %v184
    %v233 = vpack.c.b16 %v189, %v185
    %v234 = vpack.c.b16 %v190, %v186
    %v235 = vpack.c.b16 %v191, %v187
    %v236 = vpack.c.b16 %v196, %v192
    %v237 = vpack.c.b16 %v197, %v193
    %v238 = vpack.c.b16 %v198, %v194
    %v239 = vpack.c.b16 %v199, %v195
    %v240 = vpack.c.b16 %v204, %v200
    %v241 = vpack.c.b16 %v205, %v201
    %v242 = vpack.c.b16 %v206, %v202
    %v243 = vpack.c.b16 %v207, %v203
    %v244 = vpack.c.b16 %v212, %v208
    %v245 = vpack.c.b16 %v213, %v209
    %v246 = vpack.c.b16 %v214, %v210
    %v247 = vpack.c.b16 %v215, %v211
    %280 = vmatprep.subr.bf16.mxu0 %v217
    %281 = vmatpush1.bf16.msra.mxu0 %v216
    %282 = vmatprep.subr.bf16.mxu0 %v221
    %283 = vmatpush1.bf16.msra.mxu0 %v220
    %284 = vmatprep.subr.bf16.mxu0 %v225
    %285 = vmatpush1.bf16.msra.mxu0 %v224
    %286 = vmatprep.subr.bf16.mxu0 %v229
    %287 = vmatpush1.bf16.msra.mxu0 %v228
    %288 = vmatprep.subr.bf16.mxu0 %v233
    %289 = vmatpush1.bf16.msra.mxu0 %v232
    %290 = vmatprep.subr.bf16.mxu0 %v237
    %291 = vmatpush1.bf16.msra.mxu0 %v236
    %292 = vmatprep.subr.bf16.mxu0 %v241
    %293 = vmatpush1.bf16.msra.mxu0 %v240
    %294 = vmatprep.subr.bf16.mxu0 %v245
    %295 = vmatpush1.bf16.msra.mxu0 %v244
    %296 = vmatprep.subr.bf16.mxu0 0
    %297 = vmatpush1.bf16.msra.mxu0 0
    %298 = vmatprep.subr.bf16.mxu0 0
    %299 = vmatpush1.bf16.msra.mxu0 0
    %300 = vmatprep.subr.bf16.mxu0 0
    %301 = vmatpush1.bf16.msra.mxu0 0
    %302 = vmatprep.subr.bf16.mxu0 0
    %303 = vmatpush1.bf16.msra.mxu0 0
    %304 = vmatprep.subr.bf16.mxu0 0
    %305 = vmatpush1.bf16.msra.mxu0 0
    %306 = vmatprep.subr.bf16.mxu0 0
    %307 = vmatpush1.bf16.msra.mxu0 0
    %308 = vmatprep.subr.bf16.mxu0 0
    %309 = vmatpush1.bf16.msra.mxu0 0
    %310 = vmatprep.subr.bf16.mxu0 0
    %311 = vmatpush1.bf16.msra.mxu0 0
    %312 = vmatprep.mubr.bf16.mxu0 0
    %313 = vmatmul.mubr.bf16.gmra.mrb[0].mxu0 %v65
    %v314 = vpop.f32.mrb[0].mxu0
    %v315 = vadd.f32 %v103, %v314
    %v316 = vpop.f32.mrb[0].mxu0
    %v317 = vadd.f32 %v107, %v316
    %v318 = vpop.f32.mrb[0].mxu0
    %v319 = vadd.f32 %v103, %v318
    %v320 = vpop.f32.mrb[0].mxu0
    %v321 = vadd.f32 %v107, %v320
    %322 = vdwg.mxu0
    %323 = vmatprep.subr.bf16.mxu0 %v219
    %324 = vmatpush1.bf16.msra.mxu0 %v218
    %325 = vmatprep.subr.bf16.mxu0 %v223
    %326 = vmatpush1.bf16.msra.mxu0 %v222
    %327 = vmatprep.subr.bf16.mxu0 %v227
    %328 = vmatpush1.bf16.msra.mxu0 %v226
    %329 = vmatprep.subr.bf16.mxu0 %v231
    %330 = vmatpush1.bf16.msra.mxu0 %v230
    %331 = vmatprep.subr.bf16.mxu0 %v235
    %332 = vmatpush1.bf16.msra.mxu0 %v234
    %333 = vmatprep.subr.bf16.mxu0 %v239
    %334 = vmatpush1.bf16.msra.mxu0 %v238
    %335 = vmatprep.subr.bf16.mxu0 %v243
    %336 = vmatpush1.bf16.msra.mxu0 %v242
    %337 = vmatprep.subr.bf16.mxu0 %v247
    %338 = vmatpush1.bf16.msra.mxu0 %v246
    %339 = vmatprep.subr.bf16.mxu0 0
    %340 = vmatpush1.bf16.msra.mxu0 0
    %341 = vmatprep.subr.bf16.mxu0 0
    %342 = vmatpush1.bf16.msra.mxu0 0
    %343 = vmatprep.subr.bf16.mxu0 0
    %344 = vmatpush1.bf16.msra.mxu0 0
    %345 = vmatprep.subr.bf16.mxu0 0
    %346 = vmatpush1.bf16.msra.mxu0 0
    %347 = vmatprep.subr.bf16.mxu0 0
    %348 = vmatpush1.bf16.msra.mxu0 0
    %349 = vmatprep.subr.bf16.mxu0 0
    %350 = vmatpush1.bf16.msra.mxu0 0
    %351 = vmatprep.subr.bf16.mxu0 0
    %352 = vmatpush1.bf16.msra.mxu0 0
    %353 = vmatprep.subr.bf16.mxu0 0
    %354 = vmatpush1.bf16.msra.mxu0 0
    %355 = vmatprep.mubr.bf16.mxu0 0
    %356 = vmatmul.mubr.bf16.gmra.mrb[0].mxu0 %v65
    %v357 = vpop.f32.mrb[0].mxu0
    %v358 = vadd.f32 %v111, %v357
    %v359 = vpop.f32.mrb[0].mxu0
    %v360 = vadd.f32 %v115, %v359
    %v361 = vpop.f32.mrb[0].mxu0
    %v362 = vadd.f32 %v111, %v361
    %v363 = vpop.f32.mrb[0].mxu0
    %v364 = vadd.f32 %v115, %v363
    %365 = vdwg.mxu0
    %v366 = vmax.f32 %v315, 0.0
    %v367 = vmax.f32 %v317, 0.0
    %v368 = vmax.f32 %v358, 0.0
    %v369 = vmax.f32 %v360, 0.0
    %v370 = vmax.f32 %v319, 0.0
    %v371 = vmax.f32 %v321, 0.0
    %v372 = vmax.f32 %v362, 0.0
    %v373 = vmax.f32 %v364, 0.0
    %v374 = vpack.c.bf16 %v370, %v366
    %v375 = vpack.c.bf16 %v371, %v367
    %v376 = vpack.c.bf16 %v372, %v368
    %v377 = vpack.c.bf16 %v373, %v369
    %v378 = vld [vmem:[#allocation7] sm:$0xf]
    %v379 = vld [vmem:[#allocation7 + $0x4] sm:$0xf]
    %v380 = vld [vmem:[#allocation7 + $0x8] sm:$0xf]
    %v381 = vld [vmem:[#allocation7 + $0xc] sm:$0xf]
    %v382 = vld [vmem:[#allocation7 + $0x10] sm:$0xf]
    %v383 = vld [vmem:[#allocation7 + $0x14] sm:$0xf]
    %v384 = vld [vmem:[#allocation7 + $0x18] sm:$0xf]
    %v385 = vld [vmem:[#allocation7 + $0x1c] sm:$0xf]
    %v386 = vld [vmem:[#allocation7 + $0x20] sm:$0xf]
    %v387 = vld [vmem:[#allocation7 + $0x24] sm:$0xf]
    %v388 = vld [vmem:[#allocation7 + $0x28] sm:$0xf]
    %v389 = vld [vmem:[#allocation7 + $0x2c] sm:$0xf]
    %v390 = vld [vmem:[#allocation7 + $0x30] sm:$0xf]
    %v391 = vld [vmem:[#allocation7 + $0x34] sm:$0xf]
    %v392 = vld [vmem:[#allocation7 + $0x38] sm:$0xf]
    %v393 = vld [vmem:[#allocation7 + $0x3c] sm:$0xf]
    %v394 = vld [vmem:[#allocation7 + $0x40] sm:$0xf]
    %v395 = vld [vmem:[#allocation7 + $0x44] sm:$0xf]
    %v396 = vld [vmem:[#allocation7 + $0x48] sm:$0xf]
    %v397 = vld [vmem:[#allocation7 + $0x4c] sm:$0xf]
    %v398 = vld [vmem:[#allocation7 + $0x50] sm:$0xf]
    %v399 = vld [vmem:[#allocation7 + $0x54] sm:$0xf]
    %v400 = vld [vmem:[#allocation7 + $0x58] sm:$0xf]
    %v401 = vld [vmem:[#allocation7 + $0x5c] sm:$0xf]
    %v402 = vld [vmem:[#allocation7 + $0x60] sm:$0xf]
    %v403 = vld [vmem:[#allocation7 + $0x64] sm:$0xf]
    %v404 = vld [vmem:[#allocation7 + $0x68] sm:$0xf]
    %v405 = vld [vmem:[#allocation7 + $0x6c] sm:$0xf]
    %v406 = vld [vmem:[#allocation7 + $0x70] sm:$0xf]
    %v407 = vld [vmem:[#allocation7 + $0x74] sm:$0xf]
    %v408 = vld [vmem:[#allocation7 + $0x78] sm:$0xf]
    %v409 = vld [vmem:[#allocation7 + $0x7c] sm:$0xf]
    %v410 = vld [vmem:[#allocation7 + $0x80] sm:$0xf]
    %v411 = vld [vmem:[#allocation7 + $0x84] sm:$0xf]
    %v412 = vld [vmem:[#allocation7 + $0x88] sm:$0xf]
    %v413 = vld [vmem:[#allocation7 + $0x8c] sm:$0xf]
    %v414 = vld [vmem:[#allocation7 + $0x90] sm:$0xf]
    %v415 = vld [vmem:[#allocation7 + $0x94] sm:$0xf]
    %v416 = vld [vmem:[#allocation7 + $0x98] sm:$0xf]
    %v417 = vld [vmem:[#allocation7 + $0x9c] sm:$0xf]
    %v418 = vld [vmem:[#allocation7 + $0xa0] sm:$0xf]
    %v419 = vld [vmem:[#allocation7 + $0xa4] sm:$0xf]
    %v420 = vld [vmem:[#allocation7 + $0xa8] sm:$0xf]
    %v421 = vld [vmem:[#allocation7 + $0xac] sm:$0xf]
    %v422 = vld [vmem:[#allocation7 + $0xb0] sm:$0xf]
    %v423 = vld [vmem:[#allocation7 + $0xb4] sm:$0xf]
    %v424 = vld [vmem:[#allocation7 + $0xb8] sm:$0xf]
    %v425 = vld [vmem:[#allocation7 + $0xbc] sm:$0xf]
    %v426 = vld [vmem:[#allocation7 + $0xc0] sm:$0xf]
    %v427 = vld [vmem:[#allocation7 + $0xc4] sm:$0xf]
    %v428 = vld [vmem:[#allocation7 + $0xc8] sm:$0xf]
    %v429 = vld [vmem:[#allocation7 + $0xcc] sm:$0xf]
    %v430 = vld [vmem:[#allocation7 + $0xd0] sm:$0xf]
    %v431 = vld [vmem:[#allocation7 + $0xd4] sm:$0xf]
    %v432 = vld [vmem:[#allocation7 + $0xd8] sm:$0xf]
    %v433 = vld [vmem:[#allocation7 + $0xdc] sm:$0xf]
    %v434 = vld [vmem:[#allocation7 + $0xe0] sm:$0xf]
    %v435 = vld [vmem:[#allocation7 + $0xe4] sm:$0xf]
    %v436 = vld [vmem:[#allocation7 + $0xe8] sm:$0xf]
    %v437 = vld [vmem:[#allocation7 + $0xec] sm:$0xf]
    %v438 = vld [vmem:[#allocation7 + $0xf0] sm:$0xf]
    %v439 = vld [vmem:[#allocation7 + $0xf4] sm:$0xf]
    %v440 = vld [vmem:[#allocation7 + $0xf8] sm:$0xf]
    %v441 = vld [vmem:[#allocation7 + $0xfc] sm:$0xf]
    %v442 = vld [vmem:[%s4] sm:$0x1]
    %v444 = vlaneseq
    %v445 = vshrl.u32 %v444, 7
    %v446 = vsub.s32 0, %v445
    %v447 = vrot.slane %v442, %v446
    %v513 = vunpack.c.l.b16 %v378
    %v514 = vunpack.c.l.b16 %v379
    %v515 = vunpack.c.l.b16 %v380
    %v516 = vunpack.c.l.b16 %v381
    %v517 = vunpack.c.l.b16 %v382
    %v518 = vunpack.c.l.b16 %v383
    %v519 = vunpack.c.l.b16 %v384
    %v520 = vunpack.c.l.b16 %v385
    %v521 = vunpack.c.l.b16 %v386
    %v522 = vunpack.c.l.b16 %v387
    %v523 = vunpack.c.l.b16 %v388
    %v524 = vunpack.c.l.b16 %v389
    %v525 = vunpack.c.l.b16 %v390
    %v526 = vunpack.c.l.b16 %v391
    %v527 = vunpack.c.l.b16 %v392
    %v528 = vunpack.c.l.b16 %v393
    %v529 = vunpack.c.l.b16 %v394
    %v530 = vunpack.c.l.b16 %v395
    %v531 = vunpack.c.l.b16 %v396
    %v532 = vunpack.c.l.b16 %v397
    %v533 = vunpack.c.l.b16 %v398
    %v534 = vunpack.c.l.b16 %v399
    %v535 = vunpack.c.l.b16 %v400
    %v536 = vunpack.c.l.b16 %v401
    %v537 = vunpack.c.l.b16 %v402
    %v538 = vunpack.c.l.b16 %v403
    %v539 = vunpack.c.l.b16 %v404
    %v540 = vunpack.c.l.b16 %v405
    %v541 = vunpack.c.l.b16 %v406
    %v542 = vunpack.c.l.b16 %v407
    %v543 = vunpack.c.l.b16 %v408
    %v544 = vunpack.c.l.b16 %v409
    %v545 = vunpack.c.l.b16 %v410
    %v546 = vunpack.c.l.b16 %v411
    %v547 = vunpack.c.l.b16 %v412
    %v548 = vunpack.c.l.b16 %v413
    %v549 = vunpack.c.l.b16 %v414
    %v550 = vunpack.c.l.b16 %v415
    %v551 = vunpack.c.l.b16 %v416
    %v552 = vunpack.c.l.b16 %v417
    %v553 = vunpack.c.l.b16 %v418
    %v554 = vunpack.c.l.b16 %v419
    %v555 = vunpack.c.l.b16 %v420
    %v556 = vunpack.c.l.b16 %v421
    %v557 = vunpack.c.l.b16 %v422
    %v558 = vunpack.c.l.b16 %v423
    %v559 = vunpack.c.l.b16 %v424
    %v560 = vunpack.c.l.b16 %v425
    %v561 = vunpack.c.l.b16 %v426
    %v562 = vunpack.c.l.b16 %v427
    %v563 = vunpack.c.l.b16 %v428
    %v564 = vunpack.c.l.b16 %v429
    %v565 = vunpack.c.l.b16 %v430
    %v566 = vunpack.c.l.b16 %v431
    %v567 = vunpack.c.l.b16 %v432
    %v568 = vunpack.c.l.b16 %v433
    %v569 = vunpack.c.l.b16 %v434
    %v570 = vunpack.c.l.b16 %v435
    %v571 = vunpack.c.l.b16 %v436
    %v572 = vunpack.c.l.b16 %v437
    %v573 = vunpack.c.l.b16 %v438
    %v574 = vunpack.c.l.b16 %v439
    %v575 = vunpack.c.l.b16 %v440
    %v576 = vunpack.c.l.b16 %v441
    %v577 = vpack.c.b16 %v514, %v513
    %v578 = vpack.c.b16 %v516, %v515
    %v579 = vpack.c.b16 %v518, %v517
    %v580 = vpack.c.b16 %v520, %v519
    %v581 = vpack.c.b16 %v522, %v521
    %v582 = vpack.c.b16 %v524, %v523
    %v583 = vpack.c.b16 %v526, %v525
    %v584 = vpack.c.b16 %v528, %v527
    %v585 = vpack.c.b16 %v530, %v529
    %v586 = vpack.c.b16 %v532, %v531
    %v587 = vpack.c.b16 %v534, %v533
    %v588 = vpack.c.b16 %v536, %v535
    %v589 = vpack.c.b16 %v538, %v537
    %v590 = vpack.c.b16 %v540, %v539
    %v591 = vpack.c.b16 %v542, %v541
    %v592 = vpack.c.b16 %v544, %v543
    %v593 = vpack.c.b16 %v546, %v545
    %v594 = vpack.c.b16 %v548, %v547
    %v595 = vpack.c.b16 %v550, %v549
    %v596 = vpack.c.b16 %v552, %v551
    %v597 = vpack.c.b16 %v554, %v553
    %v598 = vpack.c.b16 %v556, %v555
    %v599 = vpack.c.b16 %v558, %v557
    %v600 = vpack.c.b16 %v560, %v559
    %v601 = vpack.c.b16 %v562, %v561
    %v602 = vpack.c.b16 %v564, %v563
    %v603 = vpack.c.b16 %v566, %v565
    %v604 = vpack.c.b16 %v568, %v567
    %v605 = vpack.c.b16 %v570, %v569
    %v606 = vpack.c.b16 %v572, %v571
    %v607 = vpack.c.b16 %v574, %v573
    %v608 = vpack.c.b16 %v576, %v575
    %641 = vmatprep.subr.bf16.mxu0 0
    %642 = vmatpush1.bf16.msra.mxu0 %v577
    %643 = vmatprep.subr.bf16.mxu0 0
    %644 = vmatpush1.bf16.msra.mxu0 %v578
    %645 = vmatprep.subr.bf16.mxu0 0
    %646 = vmatpush1.bf16.msra.mxu0 %v579
    %647 = vmatprep.subr.bf16.mxu0 0
    %648 = vmatpush1.bf16.msra.mxu0 %v580
    %649 = vmatprep.subr.bf16.mxu0 0
    %650 = vmatpush1.bf16.msra.mxu0 %v581
    %651 = vmatprep.subr.bf16.mxu0 0
    %652 = vmatpush1.bf16.msra.mxu0 %v582
    %653 = vmatprep.subr.bf16.mxu0 0
    %654 = vmatpush1.bf16.msra.mxu0 %v583
    %655 = vmatprep.subr.bf16.mxu0 0
    %656 = vmatpush1.bf16.msra.mxu0 %v584
    %657 = vmatprep.subr.bf16.mxu0 0
    %658 = vmatpush1.bf16.msra.mxu0 %v585
    %659 = vmatprep.subr.bf16.mxu0 0
    %660 = vmatpush1.bf16.msra.mxu0 %v586
    %661 = vmatprep.subr.bf16.mxu0 0
    %662 = vmatpush1.bf16.msra.mxu0 %v587
    %663 = vmatprep.subr.bf16.mxu0 0
    %664 = vmatpush1.bf16.msra.mxu0 %v588
    %665 = vmatprep.subr.bf16.mxu0 0
    %666 = vmatpush1.bf16.msra.mxu0 %v589
    %667 = vmatprep.subr.bf16.mxu0 0
    %668 = vmatpush1.bf16.msra.mxu0 %v590
    %669 = vmatprep.subr.bf16.mxu0 0
    %670 = vmatpush1.bf16.msra.mxu0 %v591
    %671 = vmatprep.subr.bf16.mxu0 0
    %672 = vmatpush1.bf16.msra.mxu0 %v592
    %673 = vmatprep.mubr.bf16.mxu0 %v375
    %674 = vmatmul.mubr.bf16.gmra.mrb[0].mxu0 %v374
    %v675 = vpop.f32.mrb[0].mxu0
    %v676 = vadd.f32 %v447, %v675
    %v677 = vpop.f32.mrb[0].mxu0
    %v678 = vpop.f32.mrb[0].mxu0
    %v679 = vadd.f32 %v447, %v678
    %v680 = vpop.f32.mrb[0].mxu0
    %681 = vdwg.mxu0
    %682 = vmatprep.subr.bf16.mxu0 0
    %683 = vmatpush1.bf16.msra.mxu0 %v593
    %684 = vmatprep.subr.bf16.mxu0 0
    %685 = vmatpush1.bf16.msra.mxu0 %v594
    %686 = vmatprep.subr.bf16.mxu0 0
    %687 = vmatpush1.bf16.msra.mxu0 %v595
    %688 = vmatprep.subr.bf16.mxu0 0
    %689 = vmatpush1.bf16.msra.mxu0 %v596
    %690 = vmatprep.subr.bf16.mxu0 0
    %691 = vmatpush1.bf16.msra.mxu0 %v597
    %692 = vmatprep.subr.bf16.mxu0 0
    %693 = vmatpush1.bf16.msra.mxu0 %v598
    %694 = vmatprep.subr.bf16.mxu0 0
    %695 = vmatpush1.bf16.msra.mxu0 %v599
    %696 = vmatprep.subr.bf16.mxu0 0
    %697 = vmatpush1.bf16.msra.mxu0 %v600
    %698 = vmatprep.subr.bf16.mxu0 0
    %699 = vmatpush1.bf16.msra.mxu0 %v601
    %700 = vmatprep.subr.bf16.mxu0 0
    %701 = vmatpush1.bf16.msra.mxu0 %v602
    %702 = vmatprep.subr.bf16.mxu0 0
    %703 = vmatpush1.bf16.msra.mxu0 %v603
    %704 = vmatprep.subr.bf16.mxu0 0
    %705 = vmatpush1.bf16.msra.mxu0 %v604
    %706 = vmatprep.subr.bf16.mxu0 0
    %707 = vmatpush1.bf16.msra.mxu0 %v605
    %708 = vmatprep.subr.bf16.mxu0 0
    %709 = vmatpush1.bf16.msra.mxu0 %v606
    %710 = vmatprep.subr.bf16.mxu0 0
    %711 = vmatpush1.bf16.msra.mxu0 %v607
    %712 = vmatprep.subr.bf16.mxu0 0
    %713 = vmatpush1.bf16.msra.mxu0 %v608
    %714 = vmatprep.mubr.bf16.mxu0 %v377
    %715 = vmatmul.mubr.bf16.gmra.mrb[0].mxu0 %v376
    %v716 = vpop.f32.mrb[0].mxu0
    %v717 = vadd.f32 %v676, %v716
    %v718 = vpop.f32.mrb[0].mxu0
    %v719 = vpop.f32.mrb[0].mxu0
    %v720 = vadd.f32 %v679, %v719
    %v721 = vpop.f32.mrb[0].mxu0
    %722 = vdwg.mxu0
    %723 = vst [vmem:[#allocation8] sm:$0xff] %v717
    %724 = vst [vmem:[#allocation8 + $0x8] sm:$0xff] %v720
    // Predicated region
    $region34: #{tpu_custom_call.1} parent=1 // pred_check
      _
    $region35: #{tpu_custom_call.1} parent=1 // pred_check_branch
      %726 = sbr.rel (0) target = $region37
    $region36: #{tpu_custom_call.1} parent=1 // pred_region
      %s728 = ssub.s32 256, 256
      %729 = vsyncadd [#allocation4], %s728
      %s730 = sshll.u32 [#allocation8], 4
      %s731 = int_to_ptr.vmem [resolvable:$true] %s730
      %736 = dma.vmem_to_hbm [thread:$0]  %s731, 256, %s5, [#allocation4], 128, 128, 8
    $region37: #{tpu_custom_call.1} parent=1 // pred_fallthru
      _
    // Predicated region
    $region38: #{tpu_custom_call.1} parent=1 // pred_check
      _
    $region39: #{tpu_custom_call.1} parent=1 // pred_check_branch
      %738 = sbr.rel (0) target = $region41
    $region40: #{tpu_custom_call.1} parent=1 // pred_region
      %739 = dma.done [#allocation4], 256
    $region41: #{tpu_custom_call.1} parent=1 // pred_fallthru
      _
    %740 = vsyncpa [#allocation3], 1
    %741 = vsyncpa [#allocation6], 1
    %742 = vsyncpa [#allocation4], 1

</llo_original>
